<compile_context>
chip_gen: v5e
topology: v5e:2x2
jax: 0.10.0
libtpu: 0.0.40
codegen_flags: <defaults>
</compile_context>

<pallas_src>
import functools

import jax
import jax.numpy as jnp
from jax.experimental import pallas as pl
from jax.experimental.pallas import tpu as pltpu


def _round_up(x, m):
    return ((x + m - 1) // m) * m


def _silu(x):
    # tanh form: silu(x) = x * sigmoid(x) = x * 0.5 * (1 + tanh(x/2)).
    # One EUP op per element instead of exp + reciprocal.
    return x * (0.5 * (1.0 + jnp.tanh(0.5 * x)))


# ---------------------------------------------------------------------------
# Kernel
# ---------------------------------------------------------------------------
def _dynamics_kernel(x_ref, w1_ref, b1_ref, wh_ref, bh_ref,
                     wout_ref, bout_ref, bounds_ref, out_ref, *, eo):
    """One batch tile through the whole ensemble MLP.

    x_ref:      (BM, K_in)   f32, members packed (and zero-padded) in lanes.
    w*_ref:     bf16 block-diagonal (zero-padded) weights, resident in VMEM.
    b*_ref:     f32 packed biases.
    bounds_ref: (2, N_out) f32, row0 = min_logvar lanes, row1 = max_logvar lanes.
    out_ref:    (BM, N_out) f32, lanes [0, eo) = mu, [eo, 2*eo) = var, rest pad.
    """
    h = jnp.dot(x_ref[...].astype(jnp.bfloat16), w1_ref[...],
                preferred_element_type=jnp.float32) + b1_ref[...]
    h = _silu(h)

    # Three hidden layers, unrolled.
    for l in range(wh_ref.shape[0]):
        h = jnp.dot(h.astype(jnp.bfloat16), wh_ref[l],
                    preferred_element_type=jnp.float32) + bh_ref[l]
        h = _silu(h)

    # Single fused output head (mu lanes | log_var lanes | zero pad).
    out = jnp.dot(h.astype(jnp.bfloat16), wout_ref[...],
                  preferred_element_type=jnp.float32) + bout_ref[...]

    min_b = bounds_ref[0:1, :]
    max_b = bounds_ref[1:2, :]
    lv = max_b - jax.nn.softplus(max_b - out)
    lv = min_b + jax.nn.softplus(lv - min_b)

    col = jax.lax.broadcasted_iota(jnp.int32, out.shape, 1)
    out_ref[...] = jnp.where(col >= eo, jnp.exp(lv), out)


# ---------------------------------------------------------------------------
# Host-side (one-time) parameter packing
# ---------------------------------------------------------------------------
def _block_diag(w):
    """(E, din, dout) per-member weights -> (E*din, E*dout) block-diagonal."""
    E, din, dout = w.shape
    eye = jnp.eye(E, dtype=w.dtype)
    return jnp.einsum('eio,ef->eifo', w, eye).reshape(E * din, E * dout)


def _pack_bias(b):
    """(E, 1, dout) -> (1, E*dout), member-major lane order."""
    E, _, dout = b.shape
    return b.reshape(E * dout)[None, :]


def _pad2(a, rows, cols):
    r, c = a.shape
    return jnp.pad(a, ((0, rows - r), (0, cols - c)))


def pack_params(params, min_logvar, max_logvar, *, dtype=jnp.bfloat16):
    """One-time layout repacking; call once and reuse across forward calls."""
    w1, b1, w2, b2, w3, b3, w4, b4, wo, bo = params
    E, D_in, H = w1.shape
    O = wo.shape[-1] // 2
    EO = E * O

    K_in = _round_up(E * D_in, 128)          # 84  -> 128
    K_h = _round_up(E * H, 128)              # 224 -> 256
    N_out = _round_up(2 * EO, 128)           # 126 -> 128

    w1_p = _pad2(_block_diag(w1), K_in, K_h).astype(dtype)
    b1_p = _pad2(_pack_bias(b1), 1, K_h)

    wh_p = jnp.stack([_pad2(_block_diag(w), K_h, K_h).astype(dtype)
                      for w in (w2, w3, w4)])
    bh_p = jnp.stack([_pad2(_pack_bias(b), 1, K_h) for b in (b2, b3, b4)])

    # Fused output head: all mu columns first, then all log_var columns.
    w_out = jnp.concatenate(
        [_block_diag(wo[:, :, :O]), _block_diag(wo[:, :, O:])], axis=1)
    b_out = jnp.concatenate(
        [_pack_bias(bo[:, :, :O]), _pack_bias(bo[:, :, O:])], axis=1)
    w_out_p = _pad2(w_out, K_h, N_out).astype(dtype)
    b_out_p = _pad2(b_out, 1, N_out)

    # Bounds only matter on the lv lanes; mu / pad lanes get zeros (finite, unused).
    min_row = _pad2(jnp.concatenate(
        [jnp.zeros((1, EO), jnp.float32), jnp.tile(min_logvar, (1, E))], axis=1),
        1, N_out)
    max_row = _pad2(jnp.concatenate(
        [jnp.zeros((1, EO), jnp.float32), jnp.tile(max_logvar, (1, E))], axis=1),
        1, N_out)
    bounds = jnp.concatenate([min_row, max_row], axis=0)

    return dict(
        w1=w1_p, b1=b1_p, wh=wh_p, bh=bh_p,
        w_out=w_out_p, b_out=b_out_p, bounds=bounds,
        ensemble_size=E, input_size=D_in, output_size=O,
    )


# ---------------------------------------------------------------------------
# Forward wrapper
# ---------------------------------------------------------------------------
def _choose_bm(B, block_b):
    if B <= 512:
        return B                               # tiny batch: single step
    if B <= 2 * block_b:
        # >= 2 grid steps so dimension_semantics=("parallel",) can use both
        # v7x TensorCores (harmless on v5e/v6e).
        return min(block_b, _round_up(pl.cdiv(B, 2), 256))
    return block_b


def dynamics_model_forward(x, packed, *, block_b=2048):
    """x: (E, B, D_in) float32, packed = pack_params(...). Returns (mu, var)."""
    E, B, D_in = x.shape
    O = packed['output_size']
    EO = E * O
    K_in = packed['w1'].shape[0]
    K_h = packed['w1'].shape[1]
    N_out = packed['w_out'].shape[1]

    # (E, B, D_in) -> (B, E*D_in) lane-packed slab, zero-padded to K_in lanes.
    x_packed = jnp.transpose(x, (1, 0, 2)).reshape(B, E * D_in)
    if E * D_in < K_in:
        x_packed = jnp.pad(x_packed, ((0, 0), (0, K_in - E * D_in)))

    BM = _choose_bm(B, block_b)
    B_pad = pl.cdiv(B, BM) * BM
    if B_pad != B:
        x_packed = jnp.pad(x_packed, ((0, B_pad - B), (0, 0)))

    def resident(arr):
        n = arr.ndim
        return pl.BlockSpec(arr.shape, lambda i, _n=n: (0,) * _n)

    weight_keys = ('w1', 'b1', 'wh', 'bh', 'w_out', 'b_out', 'bounds')
    in_specs = [pl.BlockSpec((BM, K_in), lambda i: (i, 0))] + \
               [resident(packed[k]) for k in weight_keys]
    out_specs = pl.BlockSpec((BM, N_out), lambda i: (i, 0))

    out = pl.pallas_call(
        functools.partial(_dynamics_kernel, eo=EO),
        out_shape=jax.ShapeDtypeStruct((B_pad, N_out), jnp.float32),
        grid_spec=pltpu.PrefetchScalarGridSpec(
            num_scalar_prefetch=0,
            grid=(B_pad // BM,),
            in_specs=in_specs,
            out_specs=out_specs,
        ),
        compiler_params=pltpu.CompilerParams(
            dimension_semantics=("parallel",)),
    )(x_packed, *[packed[k] for k in weight_keys])

    mu = jnp.transpose(out[:B, :EO].reshape(B, E, O), (1, 0, 2))
    var = jnp.transpose(out[:B, EO:2 * EO].reshape(B, E, O), (1, 0, 2))
    return mu, var


# ---------------------------------------------------------------------------
# Init + pure-JAX reference
# ---------------------------------------------------------------------------
def init_params(key, state_size, action_size, ensemble_size, hidden_size):
    """Deterministic truncated-normal init matching init_weights() semantics."""
    D_in = state_size + action_size
    O = state_size + 1
    dims = [(D_in, hidden_size), (hidden_size, hidden_size),
            (hidden_size, hidden_size), (hidden_size, hidden_size),
            (hidden_size, 2 * O)]
    params = []
    for (din, dout) in dims:
        key, sub = jax.random.split(key)
        std = 1.0 / (2.0 * jnp.sqrt(jnp.float32(din)))
        w = (jax.random.truncated_normal(sub, -2.0, 2.0,
                                         (ensemble_size, din, dout),
                                         dtype=jnp.float32) * std)
        b = jnp.zeros((ensemble_size, 1, dout), dtype=jnp.float32)
        params.append(w)
        params.append(b)
    return tuple(params)


def _silu_ref(x):
    return x * jax.nn.sigmoid(x)


def reference_forward(x, params, min_logvar, max_logvar):
    w1, b1, w2, b2, w3, b3, w4, b4, wo, bo = params
    h = x
    for (w, b) in [(w1, b1), (w2, b2), (w3, b3), (w4, b4)]:
        h = _silu_ref(jnp.einsum('ebi,eio->ebo', h, w) + b)
    out = jnp.einsum('ebi,eio->ebo', h, wo) + bo
    O = out.shape[-1] // 2
    mu = out[..., :O]
    log_var = out[..., O:]
    log_var = max_logvar - jax.nn.softplus(max_logvar - log_var)
    log_var = min_logvar + jax.nn.softplus(log_var - min_logvar)
    return mu, jnp.exp(log_var)


if __name__ == "__main__":
    # Small shapes consistent with the module's forward.
    state_size, action_size = 8, 4
    ensemble_size, hidden_size = 7, 32
    batch = 8
    O = state_size + 1

    key = jax.random.PRNGKey(0)
    key, kx = jax.random.split(key)
    x = jax.random.normal(kx, (ensemble_size, batch, state_size + action_size),
                          dtype=jnp.float32)

    params = init_params(key, state_size, action_size, ensemble_size, hidden_size)
    min_logvar = -jnp.ones((1, O), dtype=jnp.float32) * 10.0
    max_logvar = jnp.ones((1, O), dtype=jnp.float32) / 2.0

    # Pack once, reuse for every forward call (pure layout work).
    packed = pack_params(params, min_logvar, max_logvar)

    mu, var = dynamics_model_forward(x, packed)
    jax.block_until_ready((mu, var))

    mu_ref, var_ref = reference_forward(x, params, min_logvar, max_logvar)
    assert mu.shape == (ensemble_size, batch, O)
    assert var.shape == (ensemble_size, batch, O)
    # bf16 MXU operands (f32 accumulation) -> relaxed tolerances vs f32 reference.
    assert jnp.allclose(mu, mu_ref, rtol=5e-2, atol=5e-3)
    assert jnp.allclose(var, var_ref, rtol=5e-2, atol=5e-3)

    # Exercise the multi-step (grid > 1) / batch-padding path as well.
    key, kx2 = jax.random.split(key)
    x_big = jax.random.normal(
        kx2, (ensemble_size, 600, state_size + action_size), dtype=jnp.float32)
    mu_b, var_b = dynamics_model_forward(x_big, packed)
    jax.block_until_ready((mu_b, var_b))
    mu_b_ref, var_b_ref = reference_forward(x_big, params, min_logvar, max_logvar)
    assert jnp.allclose(mu_b, mu_b_ref, rtol=5e-2, atol=5e-3)
    assert jnp.allclose(var_b, var_b_ref, rtol=5e-2, atol=5e-3)

    print("KERNEL_OK")
</pallas_src>

<mosaic_0001>
module attributes {stable_mosaic.version = 11 : i64} {
  func.func @_dynamics_kernel(%arg0: i32, %arg1: memref<8x128xf32, #tpu.memory_space<vmem>>, %arg2: memref<128x256xbf16, #tpu.memory_space<vmem>>, %arg3: memref<1x256xf32, #tpu.memory_space<vmem>>, %arg4: memref<3x256x256xbf16, #tpu.memory_space<vmem>>, %arg5: memref<3x1x256xf32, #tpu.memory_space<vmem>>, %arg6: memref<256x128xbf16, #tpu.memory_space<vmem>>, %arg7: memref<1x128xf32, #tpu.memory_space<vmem>>, %arg8: memref<2x128xf32, #tpu.memory_space<vmem>>, %arg9: memref<8x128xf32, #tpu.memory_space<vmem>>) attributes {dimension_semantics = [#tpu.dimension_semantics<parallel>], iteration_bounds = array<i64: 1>, scalar_prefetch = 0 : i64, scratch_operands = 0 : i64, tpu.core_type = #tpu.core_type<tc>, window_params = [{transform_indices = @transform_0, window_bounds = array<i64: 8, 128>}, {pipeline_mode = #tpu.pipeline_mode<synchronous>, transform_indices = @transform_1, window_bounds = array<i64: 128, 256>}, {pipeline_mode = #tpu.pipeline_mode<synchronous>, transform_indices = @transform_2, window_bounds = array<i64: 1, 256>}, {pipeline_mode = #tpu.pipeline_mode<synchronous>, transform_indices = @transform_3, window_bounds = array<i64: 3, 256, 256>}, {pipeline_mode = #tpu.pipeline_mode<synchronous>, transform_indices = @transform_4, window_bounds = array<i64: 3, 1, 256>}, {pipeline_mode = #tpu.pipeline_mode<synchronous>, transform_indices = @transform_5, window_bounds = array<i64: 256, 128>}, {pipeline_mode = #tpu.pipeline_mode<synchronous>, transform_indices = @transform_6, window_bounds = array<i64: 1, 128>}, {pipeline_mode = #tpu.pipeline_mode<synchronous>, transform_indices = @transform_7, window_bounds = array<i64: 2, 128>}, {transform_indices = @transform_8, window_bounds = array<i64: 8, 128>}]} {
    %c0 = arith.constant 0 : index
    %c0_0 = arith.constant 0 : index
    %0 = vector.load %arg1[%c0, %c0_0] : memref<8x128xf32, #tpu.memory_space<vmem>>, vector<8x128xf32>
    %1 = arith.truncf %0 : vector<8x128xf32> to vector<8x128xbf16>
    %c0_1 = arith.constant 0 : index
    %c0_2 = arith.constant 0 : index
    %2 = vector.load %arg2[%c0_1, %c0_2] : memref<128x256xbf16, #tpu.memory_space<vmem>>, vector<128x256xbf16>
    %cst = arith.constant dense<0.000000e+00> : vector<8x256xf32>
    %3 = tpu.matmul %1, %2, %cst {dimension_numbers = #tpu.dot_dimension_numbers<[1], [0], [0], [1], [0, 0, 1, 1], [], []>} : vector<8x128xbf16>, vector<128x256xbf16>, vector<8x256xf32> -> vector<8x256xf32>
    %c0_3 = arith.constant 0 : index
    %c0_4 = arith.constant 0 : index
    %4 = vector.load %arg3[%c0_3, %c0_4] : memref<1x256xf32, #tpu.memory_space<vmem>>, vector<1x256xf32>
    %5 = vector.broadcast %4 : vector<1x256xf32> to vector<8x256xf32>
    %6 = arith.addf %3, %5 : vector<8x256xf32>
    %cst_5 = arith.constant 5.000000e-01 : f32
    %7 = vector.broadcast %cst_5 : f32 to vector<8x256xf32>
    %8 = arith.mulf %7, %6 : vector<8x256xf32>
    %9 = math.tanh %8 : vector<8x256xf32>
    %cst_6 = arith.constant 1.000000e+00 : f32
    %10 = vector.broadcast %cst_6 : f32 to vector<8x256xf32>
    %11 = arith.addf %10, %9 : vector<8x256xf32>
    %cst_7 = arith.constant 5.000000e-01 : f32
    %12 = vector.broadcast %cst_7 : f32 to vector<8x256xf32>
    %13 = arith.mulf %12, %11 : vector<8x256xf32>
    %14 = arith.mulf %6, %13 : vector<8x256xf32>
    %15 = arith.truncf %14 : vector<8x256xf32> to vector<8x256xbf16>
    %c0_8 = arith.constant 0 : index
    %c0_9 = arith.constant 0 : index
    %c0_10 = arith.constant 0 : index
    %16 = vector.load %arg4[%c0_8, %c0_9, %c0_10] : memref<3x256x256xbf16, #tpu.memory_space<vmem>>, vector<1x256x256xbf16>
    %17 = vector.shape_cast %16 : vector<1x256x256xbf16> to vector<256x256xbf16>
    %cst_11 = arith.constant dense<0.000000e+00> : vector<8x256xf32>
    %18 = tpu.matmul %15, %17, %cst_11 {dimension_numbers = #tpu.dot_dimension_numbers<[1], [0], [0], [1], [0, 0, 1, 1], [], []>} : vector<8x256xbf16>, vector<256x256xbf16>, vector<8x256xf32> -> vector<8x256xf32>
    %c0_12 = arith.constant 0 : index
    %c0_13 = arith.constant 0 : index
    %c0_14 = arith.constant 0 : index
    %19 = vector.load %arg5[%c0_12, %c0_13, %c0_14] : memref<3x1x256xf32, #tpu.memory_space<vmem>>, vector<1x1x256xf32>
    %20 = vector.shape_cast %19 : vector<1x1x256xf32> to vector<1x256xf32>
    %21 = vector.broadcast %20 : vector<1x256xf32> to vector<8x256xf32>
    %22 = arith.addf %18, %21 : vector<8x256xf32>
    %cst_15 = arith.constant 5.000000e-01 : f32
    %23 = vector.broadcast %cst_15 : f32 to vector<8x256xf32>
    %24 = arith.mulf %23, %22 : vector<8x256xf32>
    %25 = math.tanh %24 : vector<8x256xf32>
    %cst_16 = arith.constant 1.000000e+00 : f32
    %26 = vector.broadcast %cst_16 : f32 to vector<8x256xf32>
    %27 = arith.addf %26, %25 : vector<8x256xf32>
    %cst_17 = arith.constant 5.000000e-01 : f32
    %28 = vector.broadcast %cst_17 : f32 to vector<8x256xf32>
    %29 = arith.mulf %28, %27 : vector<8x256xf32>
    %30 = arith.mulf %22, %29 : vector<8x256xf32>
    %31 = arith.truncf %30 : vector<8x256xf32> to vector<8x256xbf16>
    %c1 = arith.constant 1 : index
    %c0_18 = arith.constant 0 : index
    %c0_19 = arith.constant 0 : index
    %32 = vector.load %arg4[%c1, %c0_18, %c0_19] : memref<3x256x256xbf16, #tpu.memory_space<vmem>>, vector<1x256x256xbf16>
    %33 = vector.shape_cast %32 : vector<1x256x256xbf16> to vector<256x256xbf16>
    %cst_20 = arith.constant dense<0.000000e+00> : vector<8x256xf32>
    %34 = tpu.matmul %31, %33, %cst_20 {dimension_numbers = #tpu.dot_dimension_numbers<[1], [0], [0], [1], [0, 0, 1, 1], [], []>} : vector<8x256xbf16>, vector<256x256xbf16>, vector<8x256xf32> -> vector<8x256xf32>
    %c1_21 = arith.constant 1 : index
    %c0_22 = arith.constant 0 : index
    %c0_23 = arith.constant 0 : index
    %35 = vector.load %arg5[%c1_21, %c0_22, %c0_23] : memref<3x1x256xf32, #tpu.memory_space<vmem>>, vector<1x1x256xf32>
    %36 = vector.shape_cast %35 : vector<1x1x256xf32> to vector<1x256xf32>
    %37 = vector.broadcast %36 : vector<1x256xf32> to vector<8x256xf32>
    %38 = arith.addf %34, %37 : vector<8x256xf32>
    %cst_24 = arith.constant 5.000000e-01 : f32
    %39 = vector.broadcast %cst_24 : f32 to vector<8x256xf32>
    %40 = arith.mulf %39, %38 : vector<8x256xf32>
    %41 = math.tanh %40 : vector<8x256xf32>
    %cst_25 = arith.constant 1.000000e+00 : f32
    %42 = vector.broadcast %cst_25 : f32 to vector<8x256xf32>
    %43 = arith.addf %42, %41 : vector<8x256xf32>
    %cst_26 = arith.constant 5.000000e-01 : f32
    %44 = vector.broadcast %cst_26 : f32 to vector<8x256xf32>
    %45 = arith.mulf %44, %43 : vector<8x256xf32>
    %46 = arith.mulf %38, %45 : vector<8x256xf32>
    %47 = arith.truncf %46 : vector<8x256xf32> to vector<8x256xbf16>
    %c2 = arith.constant 2 : index
    %c0_27 = arith.constant 0 : index
    %c0_28 = arith.constant 0 : index
    %48 = vector.load %arg4[%c2, %c0_27, %c0_28] : memref<3x256x256xbf16, #tpu.memory_space<vmem>>, vector<1x256x256xbf16>
    %49 = vector.shape_cast %48 : vector<1x256x256xbf16> to vector<256x256xbf16>
    %cst_29 = arith.constant dense<0.000000e+00> : vector<8x256xf32>
    %50 = tpu.matmul %47, %49, %cst_29 {dimension_numbers = #tpu.dot_dimension_numbers<[1], [0], [0], [1], [0, 0, 1, 1], [], []>} : vector<8x256xbf16>, vector<256x256xbf16>, vector<8x256xf32> -> vector<8x256xf32>
    %c2_30 = arith.constant 2 : index
    %c0_31 = arith.constant 0 : index
    %c0_32 = arith.constant 0 : index
    %51 = vector.load %arg5[%c2_30, %c0_31, %c0_32] : memref<3x1x256xf32, #tpu.memory_space<vmem>>, vector<1x1x256xf32>
    %52 = vector.shape_cast %51 : vector<1x1x256xf32> to vector<1x256xf32>
    %53 = vector.broadcast %52 : vector<1x256xf32> to vector<8x256xf32>
    %54 = arith.addf %50, %53 : vector<8x256xf32>
    %cst_33 = arith.constant 5.000000e-01 : f32
    %55 = vector.broadcast %cst_33 : f32 to vector<8x256xf32>
    %56 = arith.mulf %55, %54 : vector<8x256xf32>
    %57 = math.tanh %56 : vector<8x256xf32>
    %cst_34 = arith.constant 1.000000e+00 : f32
    %58 = vector.broadcast %cst_34 : f32 to vector<8x256xf32>
    %59 = arith.addf %58, %57 : vector<8x256xf32>
    %cst_35 = arith.constant 5.000000e-01 : f32
    %60 = vector.broadcast %cst_35 : f32 to vector<8x256xf32>
    %61 = arith.mulf %60, %59 : vector<8x256xf32>
    %62 = arith.mulf %54, %61 : vector<8x256xf32>
    %63 = arith.truncf %62 : vector<8x256xf32> to vector<8x256xbf16>
    %c0_36 = arith.constant 0 : index
    %c0_37 = arith.constant 0 : index
    %64 = vector.load %arg6[%c0_36, %c0_37] : memref<256x128xbf16, #tpu.memory_space<vmem>>, vector<256x128xbf16>
    %cst_38 = arith.constant dense<0.000000e+00> : vector<8x128xf32>
    %65 = tpu.matmul %63, %64, %cst_38 {dimension_numbers = #tpu.dot_dimension_numbers<[1], [0], [0], [1], [0, 0, 1, 1], [], []>} : vector<8x256xbf16>, vector<256x128xbf16>, vector<8x128xf32> -> vector<8x128xf32>
    %c0_39 = arith.constant 0 : index
    %c0_40 = arith.constant 0 : index
    %66 = vector.load %arg7[%c0_39, %c0_40] : memref<1x128xf32, #tpu.memory_space<vmem>>, vector<1x128xf32>
    %67 = vector.broadcast %66 : vector<1x128xf32> to vector<8x128xf32>
    %68 = arith.addf %65, %67 : vector<8x128xf32>
    %c0_41 = arith.constant 0 : index
    %c0_42 = arith.constant 0 : index
    %69 = vector.load %arg8[%c0_41, %c0_42] : memref<2x128xf32, #tpu.memory_space<vmem>>, vector<1x128xf32>
    %c1_43 = arith.constant 1 : index
    %c0_44 = arith.constant 0 : index
    %70 = vector.load %arg8[%c1_43, %c0_44] : memref<2x128xf32, #tpu.memory_space<vmem>>, vector<1x128xf32>
    %71 = vector.broadcast %70 : vector<1x128xf32> to vector<8x128xf32>
    %72 = arith.subf %71, %68 : vector<8x128xf32>
    %cst_45 = arith.constant 0.000000e+00 : f32
    %73 = vector.broadcast %cst_45 : f32 to vector<8x128xf32>
    %74 = arith.maximumf %72, %73 : vector<8x128xf32>
    %75 = vector.broadcast %cst_45 : f32 to vector<8x128xf32>
    %76 = arith.subf %72, %75 : vector<8x128xf32>
    %77 = arith.cmpf one, %76, %76 : vector<8x128xf32>
    %78 = vector.broadcast %cst_45 : f32 to vector<8x128xf32>
    %79 = arith.addf %72, %78 : vector<8x128xf32>
    %80 = math.absf %76 : vector<8x128xf32>
    %cst_46 = arith.constant 0.000000e+00 : f32
    %81 = vector.broadcast %cst_46 : f32 to vector<8x128xf32>
    %82 = arith.subf %81, %80 : vector<8x128xf32>
    %83 = math.exp %82 : vector<8x128xf32>
    %84 = math.log1p %83 : vector<8x128xf32>
    %85 = arith.addf %74, %84 : vector<8x128xf32>
    %86 = arith.select %77, %79, %85 : vector<8x128xi1>, vector<8x128xf32>
    %87 = vector.broadcast %70 : vector<1x128xf32> to vector<8x128xf32>
    %88 = arith.subf %87, %86 : vector<8x128xf32>
    %89 = vector.broadcast %69 : vector<1x128xf32> to vector<8x128xf32>
    %90 = arith.subf %88, %89 : vector<8x128xf32>
    %cst_47 = arith.constant 0.000000e+00 : f32
    %91 = vector.broadcast %cst_47 : f32 to vector<8x128xf32>
    %92 = arith.maximumf %90, %91 : vector<8x128xf32>
    %93 = vector.broadcast %cst_47 : f32 to vector<8x128xf32>
    %94 = arith.subf %90, %93 : vector<8x128xf32>
    %95 = arith.cmpf one, %94, %94 : vector<8x128xf32>
    %96 = vector.broadcast %cst_47 : f32 to vector<8x128xf32>
    %97 = arith.addf %90, %96 : vector<8x128xf32>
    %98 = math.absf %94 : vector<8x128xf32>
    %cst_48 = arith.constant 0.000000e+00 : f32
    %99 = vector.broadcast %cst_48 : f32 to vector<8x128xf32>
    %100 = arith.subf %99, %98 : vector<8x128xf32>
    %101 = math.exp %100 : vector<8x128xf32>
    %102 = math.log1p %101 : vector<8x128xf32>
    %103 = arith.addf %92, %102 : vector<8x128xf32>
    %104 = arith.select %95, %97, %103 : vector<8x128xi1>, vector<8x128xf32>
    %105 = vector.broadcast %69 : vector<1x128xf32> to vector<8x128xf32>
    %106 = arith.addf %105, %104 : vector<8x128xf32>
    %107 = tpu.iota {dimensions = array<i32: 1>} : vector<8x128xi32>
    %c63_i32 = arith.constant 63 : i32
    %108 = vector.broadcast %c63_i32 : i32 to vector<8x128xi32>
    %109 = arith.cmpi sge, %107, %108 : vector<8x128xi32>
    %110 = math.exp %106 : vector<8x128xf32>
    %111 = arith.select %109, %110, %68 : vector<8x128xi1>, vector<8x128xf32>
    %c0_49 = arith.constant 0 : index
    %c0_50 = arith.constant 0 : index
    %112 = vector.load %arg9[%c0_49, %c0_50] : memref<8x128xf32, #tpu.memory_space<vmem>>, vector<8x128xf32>
    tpu.vector_store %arg9[%c0_49, %c0_50], %111 {strides = array<i32>} : memref<8x128xf32, #tpu.memory_space<vmem>>, vector<8x128xf32>,
    return
  }
  func.func @transform_0(%arg0: i32) -> (i32, i32) {
    %c0_i32 = arith.constant 0 : i32
    %c0_i32_0 = arith.constant 0 : i32
    return %arg0, %c0_i32 : i32, i32
  }
  func.func @transform_1(%arg0: i32) -> (i32, i32) {
    %c0_i32 = arith.constant 0 : i32
    %c0_i32_0 = arith.constant 0 : i32
    %c0_i32_1 = arith.constant 0 : i32
    return %c0_i32, %c0_i32_0 : i32, i32
  }
  func.func @transform_2(%arg0: i32) -> (i32, i32) {
    %c0_i32 = arith.constant 0 : i32
    %c0_i32_0 = arith.constant 0 : i32
    %c0_i32_1 = arith.constant 0 : i32
    return %c0_i32, %c0_i32_0 : i32, i32
  }
  func.func @transform_3(%arg0: i32) -> (i32, i32, i32) {
    %c0_i32 = arith.constant 0 : i32
    %c0_i32_0 = arith.constant 0 : i32
    %c0_i32_1 = arith.constant 0 : i32
    %c0_i32_2 = arith.constant 0 : i32
    return %c0_i32, %c0_i32_0, %c0_i32_1 : i32, i32, i32
  }
  func.func @transform_4(%arg0: i32) -> (i32, i32, i32) {
    %c0_i32 = arith.constant 0 : i32
    %c0_i32_0 = arith.constant 0 : i32
    %c0_i32_1 = arith.constant 0 : i32
    %c0_i32_2 = arith.constant 0 : i32
    return %c0_i32, %c0_i32_0, %c0_i32_1 : i32, i32, i32
  }
  func.func @transform_5(%arg0: i32) -> (i32, i32) {
    %c0_i32 = arith.constant 0 : i32
    %c0_i32_0 = arith.constant 0 : i32
    %c0_i32_1 = arith.constant 0 : i32
    return %c0_i32, %c0_i32_0 : i32, i32
  }
  func.func @transform_6(%arg0: i32) -> (i32, i32) {
    %c0_i32 = arith.constant 0 : i32
    %c0_i32_0 = arith.constant 0 : i32
    %c0_i32_1 = arith.constant 0 : i32
    return %c0_i32, %c0_i32_0 : i32, i32
  }
  func.func @transform_7(%arg0: i32) -> (i32, i32) {
    %c0_i32 = arith.constant 0 : i32
    %c0_i32_0 = arith.constant 0 : i32
    %c0_i32_1 = arith.constant 0 : i32
    return %c0_i32, %c0_i32_0 : i32, i32
  }
  func.func @transform_8(%arg0: i32) -> (i32, i32) {
    %c0_i32 = arith.constant 0 : i32
    %c0_i32_0 = arith.constant 0 : i32
    return %arg0, %c0_i32 : i32, i32
  }
}

</mosaic_0001>

<llo_original>
// kernel: tpu_custom_call.1
$region0: #{tpu_custom_call.1}
  #allocation0 [shape = 'u32[]', space=smem, size = 0x4, offset = 0x4, fixed_abs, tag = 'smem constant byte address 0x4 - core index']
  #allocation1 [shape = 'u32[72,128]{1,0:T(1,128)}', space=vmem, size = 0x9000, scoped, tag = 'internal scratch']
  %s0 = inlined_call_operand.hbm [shape: f32[8,128], index: 0, kind: input, shape index: {}]
  %s1 = inlined_call_operand.hbm [shape: bf16[128,256], index: 1, kind: input, shape index: {}]
  %s2 = inlined_call_operand.hbm [shape: f32[1,256], index: 2, kind: input, shape index: {}]
  %s3 = inlined_call_operand.hbm [shape: bf16[3,256,256], index: 3, kind: input, shape index: {}]
  %s4 = inlined_call_operand.hbm [shape: f32[3,1,256], index: 4, kind: input, shape index: {}]
  %s5 = inlined_call_operand.hbm [shape: bf16[256,128], index: 5, kind: input, shape index: {}]
  %s6 = inlined_call_operand.vmem [shape: f32[1,128], index: 6, kind: input, shape index: {}]
  %s7 = inlined_call_operand.vmem [shape: f32[2,128], index: 7, kind: input, shape index: {}]
  %s8 = inlined_call_operand.hbm [shape: f32[8,128], index: 8, kind: output, shape index: {}]
  %s9 = sld [smem:[#allocation0]]
  $region66: #{tpu_custom_call.1} parent=0
    _
  %s11 = ssub.s32 1, %s9
  %s12 = scalar_select 0, %s11, %s9
  $region1: #{tpu_custom_call.1} parent=0
    #allocation2 [shape = 'u8[4096]{0}', space=vmem, size = 0x1000, scoped, tag = 'input window, operand 0, single buffered']
    #allocation3 [shape = 's32[1]{0}', space=sflag, size = 0x4, scoped, tag = 'scoped memory for tpu_custom_call.1']
    #allocation4 [shape = 's32[1]{0}', space=sflag, size = 0x4, scoped, tag = 'scoped memory for tpu_custom_call.1']
    #allocation5 [shape = 'u8[65536]{0}', space=vmem, size = 0x10000, scoped, tag = 'input window, operand 1, single buffered']
    #allocation6 [shape = 's32[1]{0}', space=sflag, size = 0x4, scoped, tag = 'scoped memory for tpu_custom_call.1']
    #allocation7 [shape = 'u8[1024]{0}', space=vmem, size = 0x400, scoped, tag = 'input window, operand 2, single buffered']
    #allocation8 [shape = 'u8[393216]{0}', space=vmem, size = 0x60000, scoped, tag = 'input window, operand 3, single buffered']
    #allocation9 [shape = 's32[1]{0}', space=sflag, size = 0x4, scoped, tag = 'scoped memory for tpu_custom_call.1']
    #allocation10 [shape = 'u8[3072]{0}', space=vmem, size = 0xc00, scoped, tag = 'input window, operand 4, single buffered']
    #allocation11 [shape = 'u8[65536]{0}', space=vmem, size = 0x10000, scoped, tag = 'input window, operand 5, single buffered']
    #allocation12 [shape = 's32[1]{0}', space=sflag, size = 0x4, scoped, tag = 'scoped memory for tpu_custom_call.1']
    #allocation13 [shape = 'u8[4096]{0}', space=vmem, size = 0x1000, scoped, tag = 'output window, operand 0, single buffered']
    %13 = vsyncpa [#allocation3], 0
    %14 = vsyncpa [#allocation6], 0
    %15 = vsyncpa [#allocation9], 0
    %16 = vsyncpa [#allocation12], 0
    %17 = vsyncpa [#allocation4], 0
    // Predicated region
    $region2: #{tpu_custom_call.1} parent=1 // pred_check
      _
    $region3: #{tpu_custom_call.1} parent=1 // pred_check_branch
      %19 = sbr.rel (0) target = $region5
    $region4: #{tpu_custom_call.1} parent=1 // pred_region
      %21 = vsyncadd [#allocation3], 0
      %s23 = sshll.u32 %s0, 4
      %s24 = int_to_ptr.hbm [resolvable:$true] %s23
      %s25 = sshll.u32 [#allocation2], 4
      %s26 = int_to_ptr.vmem [resolvable:$true] %s25
      %28 = dma.hbm_to_vmem [thread:$0]  %s24, 128, %s26, [#allocation3]
    $region5: #{tpu_custom_call.1} parent=1 // pred_fallthru
      _
    // Predicated region
    $region6: #{tpu_custom_call.1} parent=1 // pred_check
      _
    $region7: #{tpu_custom_call.1} parent=1 // pred_check_branch
      %30 = sbr.rel (0) target = $region9
    $region8: #{tpu_custom_call.1} parent=1 // pred_region
      %32 = vsyncadd [#allocation6], 0
      %s33 = sshll.u32 %s1, 4
      %s34 = int_to_ptr.hbm [resolvable:$true] %s33
      %s35 = sshll.u32 [#allocation5], 4
      %s36 = int_to_ptr.vmem [resolvable:$true] %s35
      %41 = dma.hbm_to_vmem [thread:$0]  %s34, 2048, %s36, [#allocation6], 128, 128, 8
    $region9: #{tpu_custom_call.1} parent=1 // pred_fallthru
      _
    // Predicated region
    $region10: #{tpu_custom_call.1} parent=1 // pred_check
      _
    $region11: #{tpu_custom_call.1} parent=1 // pred_check_branch
      %43 = sbr.rel (0) target = $region13
    $region12: #{tpu_custom_call.1} parent=1 // pred_region
      %45 = vsyncadd [#allocation6], 0
      %s47 = sshll.u32 %s2, 4
      %s48 = int_to_ptr.hbm [resolvable:$true] %s47
      %s49 = sshll.u32 [#allocation7], 4
      %s50 = int_to_ptr.vmem [resolvable:$true] %s49
      %52 = dma.hbm_to_vmem [thread:$0]  %s48, 32, %s50, [#allocation6]
    $region13: #{tpu_custom_call.1} parent=1 // pred_fallthru
      _
    // Predicated region
    $region14: #{tpu_custom_call.1} parent=1 // pred_check
      _
    $region15: #{tpu_custom_call.1} parent=1 // pred_check_branch
      %54 = sbr.rel (0) target = $region17
    $region16: #{tpu_custom_call.1} parent=1 // pred_region
      %56 = vsyncadd [#allocation9], 0
      %s57 = sshll.u32 %s3, 4
      %s58 = int_to_ptr.hbm [resolvable:$true] %s57
      %s59 = sshll.u32 [#allocation8], 4
      %s60 = int_to_ptr.vmem [resolvable:$true] %s59
      %65 = dma.hbm_to_vmem [thread:$0]  %s58, 12288, %s60, [#allocation9], 128, 128, 8
    $region17: #{tpu_custom_call.1} parent=1 // pred_fallthru
      _
    // Predicated region
    $region18: #{tpu_custom_call.1} parent=1 // pred_check
      _
    $region19: #{tpu_custom_call.1} parent=1 // pred_check_branch
      %67 = sbr.rel (0) target = $region21
    $region20: #{tpu_custom_call.1} parent=1 // pred_region
      %69 = vsyncadd [#allocation9], 0
      %s70 = sshll.u32 %s4, 4
      %s71 = int_to_ptr.hbm [resolvable:$true] %s70
      %s72 = sshll.u32 [#allocation10], 4
      %s73 = int_to_ptr.vmem [resolvable:$true] %s72
      %78 = dma.hbm_to_vmem [thread:$0]  %s71, 96, %s73, [#allocation9], 32, 32, 2
    $region21: #{tpu_custom_call.1} parent=1 // pred_fallthru
      _
    // Predicated region
    $region22: #{tpu_custom_call.1} parent=1 // pred_check
      _
    $region23: #{tpu_custom_call.1} parent=1 // pred_check_branch
      %80 = sbr.rel (0) target = $region25
    $region24: #{tpu_custom_call.1} parent=1 // pred_region
      %82 = vsyncadd [#allocation12], 0
      %s83 = sshll.u32 %s5, 4
      %s84 = int_to_ptr.hbm [resolvable:$true] %s83
      %s85 = sshll.u32 [#allocation11], 4
      %s86 = int_to_ptr.vmem [resolvable:$true] %s85
      %91 = dma.hbm_to_vmem [thread:$0]  %s84, 2048, %s86, [#allocation12], 64, 64, 4
    $region25: #{tpu_custom_call.1} parent=1 // pred_fallthru
      _
    // Predicated region
    $region26: #{tpu_custom_call.1} parent=1 // pred_check
      _
    $region27: #{tpu_custom_call.1} parent=1 // pred_check_branch
      %93 = sbr.rel (0) target = $region29
    $region28: #{tpu_custom_call.1} parent=1 // pred_region
      _
    $region29: #{tpu_custom_call.1} parent=1 // pred_fallthru
      _
    // Predicated region
    $region30: #{tpu_custom_call.1} parent=1 // pred_check
      _
    $region31: #{tpu_custom_call.1} parent=1 // pred_check_branch
      %95 = sbr.rel (0) target = $region33
    $region32: #{tpu_custom_call.1} parent=1 // pred_region
      _
    $region33: #{tpu_custom_call.1} parent=1 // pred_fallthru
      _
    // Predicated region
    $region34: #{tpu_custom_call.1} parent=1 // pred_check
      _
    $region35: #{tpu_custom_call.1} parent=1 // pred_check_branch
      %97 = sbr.rel (0) target = $region37
    $region36: #{tpu_custom_call.1} parent=1 // pred_region
      %99 = dma.done [#allocation3], 128
    $region37: #{tpu_custom_call.1} parent=1 // pred_fallthru
      _
    // Predicated region
    $region38: #{tpu_custom_call.1} parent=1 // pred_check
      _
    $region39: #{tpu_custom_call.1} parent=1 // pred_check_branch
      %101 = sbr.rel (0) target = $region41
    $region40: #{tpu_custom_call.1} parent=1 // pred_region
      %103 = dma.done [#allocation6], 2048
    $region41: #{tpu_custom_call.1} parent=1 // pred_fallthru
      _
    // Predicated region
    $region42: #{tpu_custom_call.1} parent=1 // pred_check
      _
    $region43: #{tpu_custom_call.1} parent=1 // pred_check_branch
      %105 = sbr.rel (0) target = $region45
    $region44: #{tpu_custom_call.1} parent=1 // pred_region
      %107 = dma.done [#allocation6], 32
    $region45: #{tpu_custom_call.1} parent=1 // pred_fallthru
      _
    // Predicated region
    $region46: #{tpu_custom_call.1} parent=1 // pred_check
      _
    $region47: #{tpu_custom_call.1} parent=1 // pred_check_branch
      %109 = sbr.rel (0) target = $region49
    $region48: #{tpu_custom_call.1} parent=1 // pred_region
      %111 = dma.done [#allocation9], 12288
    $region49: #{tpu_custom_call.1} parent=1 // pred_fallthru
      _
    // Predicated region
    $region50: #{tpu_custom_call.1} parent=1 // pred_check
      _
    $region51: #{tpu_custom_call.1} parent=1 // pred_check_branch
      %113 = sbr.rel (0) target = $region53
    $region52: #{tpu_custom_call.1} parent=1 // pred_region
      %115 = dma.done [#allocation9], 96
    $region53: #{tpu_custom_call.1} parent=1 // pred_fallthru
      _
    // Predicated region
    $region54: #{tpu_custom_call.1} parent=1 // pred_check
      _
    $region55: #{tpu_custom_call.1} parent=1 // pred_check_branch
      %117 = sbr.rel (0) target = $region57
    $region56: #{tpu_custom_call.1} parent=1 // pred_region
      %119 = dma.done [#allocation12], 2048
    $region57: #{tpu_custom_call.1} parent=1 // pred_fallthru
      _
    %v120 = vld [vmem:[#allocation2] sm:$0xff]
    %v121 = vpack.c.bf16 %v120, %v120
    %v122 = vld [vmem:[#allocation5] sm:$0xff]
    %v123 = vld [vmem:[#allocation5 + $0x8] sm:$0xff]
    %v124 = vld [vmem:[#allocation5 + $0x10] sm:$0xff]
    %v125 = vld [vmem:[#allocation5 + $0x18] sm:$0xff]
    %v126 = vld [vmem:[#allocation5 + $0x20] sm:$0xff]
    %v127 = vld [vmem:[#allocation5 + $0x28] sm:$0xff]
    %v128 = vld [vmem:[#allocation5 + $0x30] sm:$0xff]
    %v129 = vld [vmem:[#allocation5 + $0x38] sm:$0xff]
    %v130 = vld [vmem:[#allocation5 + $0x40] sm:$0xff]
    %v131 = vld [vmem:[#allocation5 + $0x48] sm:$0xff]
    %v132 = vld [vmem:[#allocation5 + $0x50] sm:$0xff]
    %v133 = vld [vmem:[#allocation5 + $0x58] sm:$0xff]
    %v134 = vld [vmem:[#allocation5 + $0x60] sm:$0xff]
    %v135 = vld [vmem:[#allocation5 + $0x68] sm:$0xff]
    %v136 = vld [vmem:[#allocation5 + $0x70] sm:$0xff]
    %v137 = vld [vmem:[#allocation5 + $0x78] sm:$0xff]
    %v138 = vld [vmem:[#allocation7] sm:$0x3]
    %v140 = vperm.slane %v138, 0
    %v141 = vperm.slane %v138, 1
    %v160 = vunpack.c.l.b16 %v122
    %v161 = vunpack.c.h.b16 %v122
    %v162 = vunpack.c.l.b16 %v123
    %v163 = vunpack.c.h.b16 %v123
    %v164 = vunpack.c.l.b16 %v124
    %v165 = vunpack.c.h.b16 %v124
    %v166 = vunpack.c.l.b16 %v125
    %v167 = vunpack.c.h.b16 %v125
    %v168 = vunpack.c.l.b16 %v126
    %v169 = vunpack.c.h.b16 %v126
    %v170 = vunpack.c.l.b16 %v127
    %v171 = vunpack.c.h.b16 %v127
    %v172 = vunpack.c.l.b16 %v128
    %v173 = vunpack.c.h.b16 %v128
    %v174 = vunpack.c.l.b16 %v129
    %v175 = vunpack.c.h.b16 %v129
    %v176 = vunpack.c.l.b16 %v130
    %v177 = vunpack.c.h.b16 %v130
    %v178 = vunpack.c.l.b16 %v131
    %v179 = vunpack.c.h.b16 %v131
    %v180 = vunpack.c.l.b16 %v132
    %v181 = vunpack.c.h.b16 %v132
    %v182 = vunpack.c.l.b16 %v133
    %v183 = vunpack.c.h.b16 %v133
    %v184 = vunpack.c.l.b16 %v134
    %v185 = vunpack.c.h.b16 %v134
    %v186 = vunpack.c.l.b16 %v135
    %v187 = vunpack.c.h.b16 %v135
    %v188 = vunpack.c.l.b16 %v136
    %v189 = vunpack.c.h.b16 %v136
    %v190 = vunpack.c.l.b16 %v137
    %v191 = vunpack.c.h.b16 %v137
    %v192 = vpack.c.b16 %v162, %v160
    %v193 = vpack.c.b16 %v163, %v161
    %v194 = vpack.c.b16 %v166, %v164
    %v195 = vpack.c.b16 %v167, %v165
    %v196 = vpack.c.b16 %v170, %v168
    %v197 = vpack.c.b16 %v171, %v169
    %v198 = vpack.c.b16 %v174, %v172
    %v199 = vpack.c.b16 %v175, %v173
    %v200 = vpack.c.b16 %v178, %v176
    %v201 = vpack.c.b16 %v179, %v177
    %v202 = vpack.c.b16 %v182, %v180
    %v203 = vpack.c.b16 %v183, %v181
    %v204 = vpack.c.b16 %v186, %v184
    %v205 = vpack.c.b16 %v187, %v185
    %v206 = vpack.c.b16 %v190, %v188
    %v207 = vpack.c.b16 %v191, %v189
    %224 = vmatpush.bf16.msra.mxu0 %v206
    %225 = vmatpush.bf16.msra.mxu0 %v204
    %226 = vmatpush.bf16.msra.mxu0 %v202
    %227 = vmatpush.bf16.msra.mxu0 %v200
    %228 = vmatpush.bf16.msra.mxu0 %v198
    %229 = vmatpush.bf16.msra.mxu0 %v196
    %230 = vmatpush.bf16.msra.mxu0 %v194
    %231 = vmatpush.bf16.msra.mxu0 %v192
    %232 = vmatmul.bf16.gmra.mxu0 %v121
    %v233 = vpop.f32.mrf.mxu0
    %v234 = vadd.f32 %v140, %v233
    %v235 = vpop.f32.mrf.mxu0
    %236 = vdwg.mxu0
    %237 = vmatpush.bf16.msra.mxu0 %v207
    %238 = vmatpush.bf16.msra.mxu0 %v205
    %239 = vmatpush.bf16.msra.mxu0 %v203
    %240 = vmatpush.bf16.msra.mxu0 %v201
    %241 = vmatpush.bf16.msra.mxu0 %v199
    %242 = vmatpush.bf16.msra.mxu0 %v197
    %243 = vmatpush.bf16.msra.mxu0 %v195
    %244 = vmatpush.bf16.msra.mxu0 %v193
    %245 = vmatmul.bf16.gmra.mxu0 %v121
    %v246 = vpop.f32.mrf.mxu0
    %v247 = vadd.f32 %v141, %v246
    %v248 = vpop.f32.mrf.mxu0
    %249 = vdwg.mxu0
    %v250 = vmul.f32 %v234, 0.5
    %v251 = vmul.f32 %v247, 0.5
    %v252 = vtanh.pop %v250
    %v253 = vtanh.pop %v251
    %v254 = vadd.f32 %v252, 1.0
    %v255 = vadd.f32 %v253, 1.0
    %v256 = vmul.f32 %v254, 0.5
    %v257 = vmul.f32 %v255, 0.5
    %v258 = vmul.f32 %v234, %v256
    %v259 = vmul.f32 %v247, %v257
    %v260 = vpack.c.bf16 %v258, %v258
    %v261 = vpack.c.bf16 %v259, %v259
    %v262 = vld [vmem:[#allocation8] sm:$0xff]
    %v263 = vld [vmem:[#allocation8 + $0x8] sm:$0xff]
    %v264 = vld [vmem:[#allocation8 + $0x10] sm:$0xff]
    %v265 = vld [vmem:[#allocation8 + $0x18] sm:$0xff]
    %v266 = vld [vmem:[#allocation8 + $0x20] sm:$0xff]
    %v267 = vld [vmem:[#allocation8 + $0x28] sm:$0xff]
    %v268 = vld [vmem:[#allocation8 + $0x30] sm:$0xff]
    %v269 = vld [vmem:[#allocation8 + $0x38] sm:$0xff]
    %v270 = vld [vmem:[#allocation8 + $0x40] sm:$0xff]
    %v271 = vld [vmem:[#allocation8 + $0x48] sm:$0xff]
    %v272 = vld [vmem:[#allocation8 + $0x50] sm:$0xff]
    %v273 = vld [vmem:[#allocation8 + $0x58] sm:$0xff]
    %v274 = vld [vmem:[#allocation8 + $0x60] sm:$0xff]
    %v275 = vld [vmem:[#allocation8 + $0x68] sm:$0xff]
    %v276 = vld [vmem:[#allocation8 + $0x70] sm:$0xff]
    %v277 = vld [vmem:[#allocation8 + $0x78] sm:$0xff]
    %v278 = vld [vmem:[#allocation8 + $0x80] sm:$0xff]
    %v279 = vld [vmem:[#allocation8 + $0x88] sm:$0xff]
    %v280 = vld [vmem:[#allocation8 + $0x90] sm:$0xff]
    %v281 = vld [vmem:[#allocation8 + $0x98] sm:$0xff]
    %v282 = vld [vmem:[#allocation8 + $0xa0] sm:$0xff]
    %v283 = vld [vmem:[#allocation8 + $0xa8] sm:$0xff]
    %v284 = vld [vmem:[#allocation8 + $0xb0] sm:$0xff]
    %v285 = vld [vmem:[#allocation8 + $0xb8] sm:$0xff]
    %v286 = vld [vmem:[#allocation8 + $0xc0] sm:$0xff]
    %v287 = vld [vmem:[#allocation8 + $0xc8] sm:$0xff]
    %v288 = vld [vmem:[#allocation8 + $0xd0] sm:$0xff]
    %v289 = vld [vmem:[#allocation8 + $0xd8] sm:$0xff]
    %v290 = vld [vmem:[#allocation8 + $0xe0] sm:$0xff]
    %v291 = vld [vmem:[#allocation8 + $0xe8] sm:$0xff]
    %v292 = vld [vmem:[#allocation8 + $0xf0] sm:$0xff]
    %v293 = vld [vmem:[#allocation8 + $0xf8] sm:$0xff]
    %v294 = vld [vmem:[#allocation10] sm:$0x3]
    %v296 = vperm.slane %v294, 0
    %v297 = vperm.slane %v294, 1
    %v332 = vunpack.c.l.b16 %v262
    %v333 = vunpack.c.h.b16 %v262
    %v334 = vunpack.c.l.b16 %v263
    %v335 = vunpack.c.h.b16 %v263
    %v336 = vunpack.c.l.b16 %v264
    %v337 = vunpack.c.h.b16 %v264
    %v338 = vunpack.c.l.b16 %v265
    %v339 = vunpack.c.h.b16 %v265
    %v340 = vunpack.c.l.b16 %v266
    %v341 = vunpack.c.h.b16 %v266
    %v342 = vunpack.c.l.b16 %v267
    %v343 = vunpack.c.h.b16 %v267
    %v344 = vunpack.c.l.b16 %v268
    %v345 = vunpack.c.h.b16 %v268
    %v346 = vunpack.c.l.b16 %v269
    %v347 = vunpack.c.h.b16 %v269
    %v348 = vunpack.c.l.b16 %v270
    %v349 = vunpack.c.h.b16 %v270
    %v350 = vunpack.c.l.b16 %v271
    %v351 = vunpack.c.h.b16 %v271
    %v352 = vunpack.c.l.b16 %v272
    %v353 = vunpack.c.h.b16 %v272
    %v354 = vunpack.c.l.b16 %v273
    %v355 = vunpack.c.h.b16 %v273
    %v356 = vunpack.c.l.b16 %v274
    %v357 = vunpack.c.h.b16 %v274
    %v358 = vunpack.c.l.b16 %v275
    %v359 = vunpack.c.h.b16 %v275
    %v360 = vunpack.c.l.b16 %v276
    %v361 = vunpack.c.h.b16 %v276
    %v362 = vunpack.c.l.b16 %v277
    %v363 = vunpack.c.h.b16 %v277
    %v364 = vunpack.c.l.b16 %v278
    %v365 = vunpack.c.h.b16 %v278
    %v366 = vunpack.c.l.b16 %v279
    %v367 = vunpack.c.h.b16 %v279
    %v368 = vunpack.c.l.b16 %v280
    %v369 = vunpack.c.h.b16 %v280
    %v370 = vunpack.c.l.b16 %v281
    %v371 = vunpack.c.h.b16 %v281
    %v372 = vunpack.c.l.b16 %v282
    %v373 = vunpack.c.h.b16 %v282
    %v374 = vunpack.c.l.b16 %v283
    %v375 = vunpack.c.h.b16 %v283
    %v376 = vunpack.c.l.b16 %v284
    %v377 = vunpack.c.h.b16 %v284
    %v378 = vunpack.c.l.b16 %v285
    %v379 = vunpack.c.h.b16 %v285
    %v380 = vunpack.c.l.b16 %v286
    %v381 = vunpack.c.h.b16 %v286
    %v382 = vunpack.c.l.b16 %v287
    %v383 = vunpack.c.h.b16 %v287
    %v384 = vunpack.c.l.b16 %v288
    %v385 = vunpack.c.h.b16 %v288
    %v386 = vunpack.c.l.b16 %v289
    %v387 = vunpack.c.h.b16 %v289
    %v388 = vunpack.c.l.b16 %v290
    %v389 = vunpack.c.h.b16 %v290
    %v390 = vunpack.c.l.b16 %v291
    %v391 = vunpack.c.h.b16 %v291
    %v392 = vunpack.c.l.b16 %v292
    %v393 = vunpack.c.h.b16 %v292
    %v394 = vunpack.c.l.b16 %v293
    %v395 = vunpack.c.h.b16 %v293
    %v396 = vpack.c.b16 %v334, %v332
    %v397 = vpack.c.b16 %v335, %v333
    %v398 = vpack.c.b16 %v338, %v336
    %v399 = vpack.c.b16 %v339, %v337
    %v400 = vpack.c.b16 %v342, %v340
    %v401 = vpack.c.b16 %v343, %v341
    %v402 = vpack.c.b16 %v346, %v344
    %v403 = vpack.c.b16 %v347, %v345
    %v404 = vpack.c.b16 %v350, %v348
    %v405 = vpack.c.b16 %v351, %v349
    %v406 = vpack.c.b16 %v354, %v352
    %v407 = vpack.c.b16 %v355, %v353
    %v408 = vpack.c.b16 %v358, %v356
    %v409 = vpack.c.b16 %v359, %v357
    %v410 = vpack.c.b16 %v362, %v360
    %v411 = vpack.c.b16 %v363, %v361
    %v412 = vpack.c.b16 %v366, %v364
    %v413 = vpack.c.b16 %v367, %v365
    %v414 = vpack.c.b16 %v370, %v368
    %v415 = vpack.c.b16 %v371, %v369
    %v416 = vpack.c.b16 %v374, %v372
    %v417 = vpack.c.b16 %v375, %v373
    %v418 = vpack.c.b16 %v378, %v376
    %v419 = vpack.c.b16 %v379, %v377
    %v420 = vpack.c.b16 %v382, %v380
    %v421 = vpack.c.b16 %v383, %v381
    %v422 = vpack.c.b16 %v386, %v384
    %v423 = vpack.c.b16 %v387, %v385
    %v424 = vpack.c.b16 %v390, %v388
    %v425 = vpack.c.b16 %v391, %v389
    %v426 = vpack.c.b16 %v394, %v392
    %v427 = vpack.c.b16 %v395, %v393
    %460 = vmatpush.bf16.msra.mxu0 %v410
    %461 = vmatpush.bf16.msra.mxu0 %v408
    %462 = vmatpush.bf16.msra.mxu0 %v406
    %463 = vmatpush.bf16.msra.mxu0 %v404
    %464 = vmatpush.bf16.msra.mxu0 %v402
    %465 = vmatpush.bf16.msra.mxu0 %v400
    %466 = vmatpush.bf16.msra.mxu0 %v398
    %467 = vmatpush.bf16.msra.mxu0 %v396
    %468 = vmatmul.bf16.gmra.mxu0 %v260
    %v469 = vpop.f32.mrf.mxu0
    %v470 = vadd.f32 %v296, %v469
    %v471 = vpop.f32.mrf.mxu0
    %472 = vdwg.mxu0
    %473 = vmatpush.bf16.msra.mxu0 %v426
    %474 = vmatpush.bf16.msra.mxu0 %v424
    %475 = vmatpush.bf16.msra.mxu0 %v422
    %476 = vmatpush.bf16.msra.mxu0 %v420
    %477 = vmatpush.bf16.msra.mxu0 %v418
    %478 = vmatpush.bf16.msra.mxu0 %v416
    %479 = vmatpush.bf16.msra.mxu0 %v414
    %480 = vmatpush.bf16.msra.mxu0 %v412
    %481 = vmatmul.bf16.gmra.mxu0 %v261
    %v482 = vpop.f32.mrf.mxu0
    %v483 = vadd.f32 %v470, %v482
    %v484 = vpop.f32.mrf.mxu0
    %485 = vdwg.mxu0
    %486 = vmatpush.bf16.msra.mxu0 %v411
    %487 = vmatpush.bf16.msra.mxu0 %v409
    %488 = vmatpush.bf16.msra.mxu0 %v407
    %489 = vmatpush.bf16.msra.mxu0 %v405
    %490 = vmatpush.bf16.msra.mxu0 %v403
    %491 = vmatpush.bf16.msra.mxu0 %v401
    %492 = vmatpush.bf16.msra.mxu0 %v399
    %493 = vmatpush.bf16.msra.mxu0 %v397
    %494 = vmatmul.bf16.gmra.mxu0 %v260
    %v495 = vpop.f32.mrf.mxu0
    %v496 = vadd.f32 %v297, %v495
    %v497 = vpop.f32.mrf.mxu0
    %498 = vdwg.mxu0
    %499 = vmatpush.bf16.msra.mxu0 %v427
    %500 = vmatpush.bf16.msra.mxu0 %v425
    %501 = vmatpush.bf16.msra.mxu0 %v423
    %502 = vmatpush.bf16.msra.mxu0 %v421
    %503 = vmatpush.bf16.msra.mxu0 %v419
    %504 = vmatpush.bf16.msra.mxu0 %v417
    %505 = vmatpush.bf16.msra.mxu0 %v415
    %506 = vmatpush.bf16.msra.mxu0 %v413
    %507 = vmatmul.bf16.gmra.mxu0 %v261
    %v508 = vpop.f32.mrf.mxu0
    %v509 = vadd.f32 %v496, %v508
    %v510 = vpop.f32.mrf.mxu0
    %511 = vdwg.mxu0
    %v512 = vmul.f32 %v483, 0.5
    %v513 = vmul.f32 %v509, 0.5
    %v514 = vtanh.pop %v512
    %v515 = vtanh.pop %v513
    %v516 = vadd.f32 %v514, 1.0
    %v517 = vadd.f32 %v515, 1.0
    %v518 = vmul.f32 %v516, 0.5
    %v519 = vmul.f32 %v517, 0.5
    %v520 = vmul.f32 %v483, %v518
    %v521 = vmul.f32 %v509, %v519
    %v522 = vpack.c.bf16 %v520, %v520
    %v523 = vpack.c.bf16 %v521, %v521
    %s524 = scalar_lea.vmem [#allocation8], 256
    %v525 = vld [vmem:[%s524] sm:$0xff]
    %v526 = vld [vmem:[%s524 + $0x8] sm:$0xff]
    %v527 = vld [vmem:[%s524 + $0x10] sm:$0xff]
    %v528 = vld [vmem:[%s524 + $0x18] sm:$0xff]
    %v529 = vld [vmem:[%s524 + $0x20] sm:$0xff]
    %v530 = vld [vmem:[%s524 + $0x28] sm:$0xff]
    %v531 = vld [vmem:[%s524 + $0x30] sm:$0xff]
    %v532 = vld [vmem:[%s524 + $0x38] sm:$0xff]
    %v533 = vld [vmem:[%s524 + $0x40] sm:$0xff]
    %v534 = vld [vmem:[%s524 + $0x48] sm:$0xff]
    %v535 = vld [vmem:[%s524 + $0x50] sm:$0xff]
    %v536 = vld [vmem:[%s524 + $0x58] sm:$0xff]
    %v537 = vld [vmem:[%s524 + $0x60] sm:$0xff]
    %v538 = vld [vmem:[%s524 + $0x68] sm:$0xff]
    %v539 = vld [vmem:[%s524 + $0x70] sm:$0xff]
    %v540 = vld [vmem:[%s524 + $0x78] sm:$0xff]
    %v541 = vld [vmem:[%s524 + $0x80] sm:$0xff]
    %v542 = vld [vmem:[%s524 + $0x88] sm:$0xff]
    %v543 = vld [vmem:[%s524 + $0x90] sm:$0xff]
    %v544 = vld [vmem:[%s524 + $0x98] sm:$0xff]
    %v545 = vld [vmem:[%s524 + $0xa0] sm:$0xff]
    %v546 = vld [vmem:[%s524 + $0xa8] sm:$0xff]
    %v547 = vld [vmem:[%s524 + $0xb0] sm:$0xff]
    %v548 = vld [vmem:[%s524 + $0xb8] sm:$0xff]
    %v549 = vld [vmem:[%s524 + $0xc0] sm:$0xff]
    %v550 = vld [vmem:[%s524 + $0xc8] sm:$0xff]
    %v551 = vld [vmem:[%s524 + $0xd0] sm:$0xff]
    %v552 = vld [vmem:[%s524 + $0xd8] sm:$0xff]
    %v553 = vld [vmem:[%s524 + $0xe0] sm:$0xff]
    %v554 = vld [vmem:[%s524 + $0xe8] sm:$0xff]
    %v555 = vld [vmem:[%s524 + $0xf0] sm:$0xff]
    %v556 = vld [vmem:[%s524 + $0xf8] sm:$0xff]
    %s557 = scalar_lea.vmem [#allocation10], 2
    %v558 = vld [vmem:[%s557] sm:$0x3]
    %v560 = vperm.slane %v558, 0
    %v561 = vperm.slane %v558, 1
    %v596 = vunpack.c.l.b16 %v525
    %v597 = vunpack.c.h.b16 %v525
    %v598 = vunpack.c.l.b16 %v526
    %v599 = vunpack.c.h.b16 %v526
    %v600 = vunpack.c.l.b16 %v527
    %v601 = vunpack.c.h.b16 %v527
    %v602 = vunpack.c.l.b16 %v528
    %v603 = vunpack.c.h.b16 %v528
    %v604 = vunpack.c.l.b16 %v529
    %v605 = vunpack.c.h.b16 %v529
    %v606 = vunpack.c.l.b16 %v530
    %v607 = vunpack.c.h.b16 %v530
    %v608 = vunpack.c.l.b16 %v531
    %v609 = vunpack.c.h.b16 %v531
    %v610 = vunpack.c.l.b16 %v532
    %v611 = vunpack.c.h.b16 %v532
    %v612 = vunpack.c.l.b16 %v533
    %v613 = vunpack.c.h.b16 %v533
    %v614 = vunpack.c.l.b16 %v534
    %v615 = vunpack.c.h.b16 %v534
    %v616 = vunpack.c.l.b16 %v535
    %v617 = vunpack.c.h.b16 %v535
    %v618 = vunpack.c.l.b16 %v536
    %v619 = vunpack.c.h.b16 %v536
    %v620 = vunpack.c.l.b16 %v537
    %v621 = vunpack.c.h.b16 %v537
    %v622 = vunpack.c.l.b16 %v538
    %v623 = vunpack.c.h.b16 %v538
    %v624 = vunpack.c.l.b16 %v539
    %v625 = vunpack.c.h.b16 %v539
    %v626 = vunpack.c.l.b16 %v540
    %v627 = vunpack.c.h.b16 %v540
    %v628 = vunpack.c.l.b16 %v541
    %v629 = vunpack.c.h.b16 %v541
    %v630 = vunpack.c.l.b16 %v542
    %v631 = vunpack.c.h.b16 %v542
    %v632 = vunpack.c.l.b16 %v543
    %v633 = vunpack.c.h.b16 %v543
    %v634 = vunpack.c.l.b16 %v544
    %v635 = vunpack.c.h.b16 %v544
    %v636 = vunpack.c.l.b16 %v545
    %v637 = vunpack.c.h.b16 %v545
    %v638 = vunpack.c.l.b16 %v546
    %v639 = vunpack.c.h.b16 %v546
    %v640 = vunpack.c.l.b16 %v547
    %v641 = vunpack.c.h.b16 %v547
    %v642 = vunpack.c.l.b16 %v548
    %v643 = vunpack.c.h.b16 %v548
    %v644 = vunpack.c.l.b16 %v549
    %v645 = vunpack.c.h.b16 %v549
    %v646 = vunpack.c.l.b16 %v550
    %v647 = vunpack.c.h.b16 %v550
    %v648 = vunpack.c.l.b16 %v551
    %v649 = vunpack.c.h.b16 %v551
    %v650 = vunpack.c.l.b16 %v552
    %v651 = vunpack.c.h.b16 %v552
    %v652 = vunpack.c.l.b16 %v553
    %v653 = vunpack.c.h.b16 %v553
    %v654 = vunpack.c.l.b16 %v554
    %v655 = vunpack.c.h.b16 %v554
    %v656 = vunpack.c.l.b16 %v555
    %v657 = vunpack.c.h.b16 %v555
    %v658 = vunpack.c.l.b16 %v556
    %v659 = vunpack.c.h.b16 %v556
    %v660 = vpack.c.b16 %v598, %v596
    %v661 = vpack.c.b16 %v599, %v597
    %v662 = vpack.c.b16 %v602, %v600
    %v663 = vpack.c.b16 %v603, %v601
    %v664 = vpack.c.b16 %v606, %v604
    %v665 = vpack.c.b16 %v607, %v605
    %v666 = vpack.c.b16 %v610, %v608
    %v667 = vpack.c.b16 %v611, %v609
    %v668 = vpack.c.b16 %v614, %v612
    %v669 = vpack.c.b16 %v615, %v613
    %v670 = vpack.c.b16 %v618, %v616
    %v671 = vpack.c.b16 %v619, %v617
    %v672 = vpack.c.b16 %v622, %v620
    %v673 = vpack.c.b16 %v623, %v621
    %v674 = vpack.c.b16 %v626, %v624
    %v675 = vpack.c.b16 %v627, %v625
    %v676 = vpack.c.b16 %v630, %v628
    %v677 = vpack.c.b16 %v631, %v629
    %v678 = vpack.c.b16 %v634, %v632
    %v679 = vpack.c.b16 %v635, %v633
    %v680 = vpack.c.b16 %v638, %v636
    %v681 = vpack.c.b16 %v639, %v637
    %v682 = vpack.c.b16 %v642, %v640
    %v683 = vpack.c.b16 %v643, %v641
    %v684 = vpack.c.b16 %v646, %v644
    %v685 = vpack.c.b16 %v647, %v645
    %v686 = vpack.c.b16 %v650, %v648
    %v687 = vpack.c.b16 %v651, %v649
    %v688 = vpack.c.b16 %v654, %v652
    %v689 = vpack.c.b16 %v655, %v653
    %v690 = vpack.c.b16 %v658, %v656
    %v691 = vpack.c.b16 %v659, %v657
    %724 = vmatpush.bf16.msra.mxu0 %v674
    %725 = vmatpush.bf16.msra.mxu0 %v672
    %726 = vmatpush.bf16.msra.mxu0 %v670
    %727 = vmatpush.bf16.msra.mxu0 %v668
    %728 = vmatpush.bf16.msra.mxu0 %v666
    %729 = vmatpush.bf16.msra.mxu0 %v664
    %730 = vmatpush.bf16.msra.mxu0 %v662
    %731 = vmatpush.bf16.msra.mxu0 %v660
    %732 = vmatmul.bf16.gmra.mxu0 %v522
    %v733 = vpop.f32.mrf.mxu0
    %v734 = vadd.f32 %v560, %v733
    %v735 = vpop.f32.mrf.mxu0
    %736 = vdwg.mxu0
    %737 = vmatpush.bf16.msra.mxu0 %v690
    %738 = vmatpush.bf16.msra.mxu0 %v688
    %739 = vmatpush.bf16.msra.mxu0 %v686
    %740 = vmatpush.bf16.msra.mxu0 %v684
    %741 = vmatpush.bf16.msra.mxu0 %v682
    %742 = vmatpush.bf16.msra.mxu0 %v680
    %743 = vmatpush.bf16.msra.mxu0 %v678
    %744 = vmatpush.bf16.msra.mxu0 %v676
    %745 = vmatmul.bf16.gmra.mxu0 %v523
    %v746 = vpop.f32.mrf.mxu0
    %v747 = vadd.f32 %v734, %v746
    %v748 = vpop.f32.mrf.mxu0
    %749 = vdwg.mxu0
    %750 = vmatpush.bf16.msra.mxu0 %v675
    %751 = vmatpush.bf16.msra.mxu0 %v673
    %752 = vmatpush.bf16.msra.mxu0 %v671
    %753 = vmatpush.bf16.msra.mxu0 %v669
    %754 = vmatpush.bf16.msra.mxu0 %v667
    %755 = vmatpush.bf16.msra.mxu0 %v665
    %756 = vmatpush.bf16.msra.mxu0 %v663
    %757 = vmatpush.bf16.msra.mxu0 %v661
    %758 = vmatmul.bf16.gmra.mxu0 %v522
    %v759 = vpop.f32.mrf.mxu0
    %v760 = vadd.f32 %v561, %v759
    %v761 = vpop.f32.mrf.mxu0
    %762 = vdwg.mxu0
    %763 = vmatpush.bf16.msra.mxu0 %v691
    %764 = vmatpush.bf16.msra.mxu0 %v689
    %765 = vmatpush.bf16.msra.mxu0 %v687
    %766 = vmatpush.bf16.msra.mxu0 %v685
    %767 = vmatpush.bf16.msra.mxu0 %v683
    %768 = vmatpush.bf16.msra.mxu0 %v681
    %769 = vmatpush.bf16.msra.mxu0 %v679
    %770 = vmatpush.bf16.msra.mxu0 %v677
    %771 = vmatmul.bf16.gmra.mxu0 %v523
    %v772 = vpop.f32.mrf.mxu0
    %v773 = vadd.f32 %v760, %v772
    %v774 = vpop.f32.mrf.mxu0
    %775 = vdwg.mxu0
    %v776 = vmul.f32 %v747, 0.5
    %v777 = vmul.f32 %v773, 0.5
    %v778 = vtanh.pop %v776
    %v779 = vtanh.pop %v777
    %v780 = vadd.f32 %v778, 1.0
    %v781 = vadd.f32 %v779, 1.0
    %v782 = vmul.f32 %v780, 0.5
    %v783 = vmul.f32 %v781, 0.5
    %v784 = vmul.f32 %v747, %v782
    %v785 = vmul.f32 %v773, %v783
    %v786 = vpack.c.bf16 %v784, %v784
    %v787 = vpack.c.bf16 %v785, %v785
    %s788 = scalar_lea.vmem [#allocation8], 512
    %v789 = vld [vmem:[%s788] sm:$0xff]
    %v790 = vld [vmem:[%s788 + $0x8] sm:$0xff]
    %v791 = vld [vmem:[%s788 + $0x10] sm:$0xff]
    %v792 = vld [vmem:[%s788 + $0x18] sm:$0xff]
    %v793 = vld [vmem:[%s788 + $0x20] sm:$0xff]
    %v794 = vld [vmem:[%s788 + $0x28] sm:$0xff]
    %v795 = vld [vmem:[%s788 + $0x30] sm:$0xff]
    %v796 = vld [vmem:[%s788 + $0x38] sm:$0xff]
    %v797 = vld [vmem:[%s788 + $0x40] sm:$0xff]
    %v798 = vld [vmem:[%s788 + $0x48] sm:$0xff]
    %v799 = vld [vmem:[%s788 + $0x50] sm:$0xff]
    %v800 = vld [vmem:[%s788 + $0x58] sm:$0xff]
    %v801 = vld [vmem:[%s788 + $0x60] sm:$0xff]
    %v802 = vld [vmem:[%s788 + $0x68] sm:$0xff]
    %v803 = vld [vmem:[%s788 + $0x70] sm:$0xff]
    %v804 = vld [vmem:[%s788 + $0x78] sm:$0xff]
    %v805 = vld [vmem:[%s788 + $0x80] sm:$0xff]
    %v806 = vld [vmem:[%s788 + $0x88] sm:$0xff]
    %v807 = vld [vmem:[%s788 + $0x90] sm:$0xff]
    %v808 = vld [vmem:[%s788 + $0x98] sm:$0xff]
    %v809 = vld [vmem:[%s788 + $0xa0] sm:$0xff]
    %v810 = vld [vmem:[%s788 + $0xa8] sm:$0xff]
    %v811 = vld [vmem:[%s788 + $0xb0] sm:$0xff]
    %v812 = vld [vmem:[%s788 + $0xb8] sm:$0xff]
    %v813 = vld [vmem:[%s788 + $0xc0] sm:$0xff]
    %v814 = vld [vmem:[%s788 + $0xc8] sm:$0xff]
    %v815 = vld [vmem:[%s788 + $0xd0] sm:$0xff]
    %v816 = vld [vmem:[%s788 + $0xd8] sm:$0xff]
    %v817 = vld [vmem:[%s788 + $0xe0] sm:$0xff]
    %v818 = vld [vmem:[%s788 + $0xe8] sm:$0xff]
    %v819 = vld [vmem:[%s788 + $0xf0] sm:$0xff]
    %v820 = vld [vmem:[%s788 + $0xf8] sm:$0xff]
    %s821 = scalar_lea.vmem [#allocation10], 4
    %v822 = vld [vmem:[%s821] sm:$0x3]
    %v824 = vperm.slane %v822, 0
    %v825 = vperm.slane %v822, 1
    %v860 = vunpack.c.l.b16 %v789
    %v861 = vunpack.c.h.b16 %v789
    %v862 = vunpack.c.l.b16 %v790
    %v863 = vunpack.c.h.b16 %v790
    %v864 = vunpack.c.l.b16 %v791
    %v865 = vunpack.c.h.b16 %v791
    %v866 = vunpack.c.l.b16 %v792
    %v867 = vunpack.c.h.b16 %v792
    %v868 = vunpack.c.l.b16 %v793
    %v869 = vunpack.c.h.b16 %v793
    %v870 = vunpack.c.l.b16 %v794
    %v871 = vunpack.c.h.b16 %v794
    %v872 = vunpack.c.l.b16 %v795
    %v873 = vunpack.c.h.b16 %v795
    %v874 = vunpack.c.l.b16 %v796
    %v875 = vunpack.c.h.b16 %v796
    %v876 = vunpack.c.l.b16 %v797
    %v877 = vunpack.c.h.b16 %v797
    %v878 = vunpack.c.l.b16 %v798
    %v879 = vunpack.c.h.b16 %v798
    %v880 = vunpack.c.l.b16 %v799
    %v881 = vunpack.c.h.b16 %v799
    %v882 = vunpack.c.l.b16 %v800
    %v883 = vunpack.c.h.b16 %v800
    %v884 = vunpack.c.l.b16 %v801
    %v885 = vunpack.c.h.b16 %v801
    %v886 = vunpack.c.l.b16 %v802
    %v887 = vunpack.c.h.b16 %v802
    %v888 = vunpack.c.l.b16 %v803
    %v889 = vunpack.c.h.b16 %v803
    %v890 = vunpack.c.l.b16 %v804
    %v891 = vunpack.c.h.b16 %v804
    %v892 = vunpack.c.l.b16 %v805
    %v893 = vunpack.c.h.b16 %v805
    %v894 = vunpack.c.l.b16 %v806
    %v895 = vunpack.c.h.b16 %v806
    %v896 = vunpack.c.l.b16 %v807
    %v897 = vunpack.c.h.b16 %v807
    %v898 = vunpack.c.l.b16 %v808
    %v899 = vunpack.c.h.b16 %v808
    %v900 = vunpack.c.l.b16 %v809
    %v901 = vunpack.c.h.b16 %v809
    %v902 = vunpack.c.l.b16 %v810
    %v903 = vunpack.c.h.b16 %v810
    %v904 = vunpack.c.l.b16 %v811
    %v905 = vunpack.c.h.b16 %v811
    %v906 = vunpack.c.l.b16 %v812
    %v907 = vunpack.c.h.b16 %v812
    %v908 = vunpack.c.l.b16 %v813
    %v909 = vunpack.c.h.b16 %v813
    %v910 = vunpack.c.l.b16 %v814
    %v911 = vunpack.c.h.b16 %v814
    %v912 = vunpack.c.l.b16 %v815
    %v913 = vunpack.c.h.b16 %v815
    %v914 = vunpack.c.l.b16 %v816
    %v915 = vunpack.c.h.b16 %v816
    %v916 = vunpack.c.l.b16 %v817
    %v917 = vunpack.c.h.b16 %v817
    %v918 = vunpack.c.l.b16 %v818
    %v919 = vunpack.c.h.b16 %v818
    %v920 = vunpack.c.l.b16 %v819
    %v921 = vunpack.c.h.b16 %v819
    %v922 = vunpack.c.l.b16 %v820
    %v923 = vunpack.c.h.b16 %v820
    %v924 = vpack.c.b16 %v862, %v860
    %v925 = vpack.c.b16 %v863, %v861
    %v926 = vpack.c.b16 %v866, %v864
    %v927 = vpack.c.b16 %v867, %v865
    %v928 = vpack.c.b16 %v870, %v868
    %v929 = vpack.c.b16 %v871, %v869
    %v930 = vpack.c.b16 %v874, %v872
    %v931 = vpack.c.b16 %v875, %v873
    %v932 = vpack.c.b16 %v878, %v876
    %v933 = vpack.c.b16 %v879, %v877
    %v934 = vpack.c.b16 %v882, %v880
    %v935 = vpack.c.b16 %v883, %v881
    %v936 = vpack.c.b16 %v886, %v884
    %v937 = vpack.c.b16 %v887, %v885
    %v938 = vpack.c.b16 %v890, %v888
    %v939 = vpack.c.b16 %v891, %v889
    %v940 = vpack.c.b16 %v894, %v892
    %v941 = vpack.c.b16 %v895, %v893
    %v942 = vpack.c.b16 %v898, %v896
    %v943 = vpack.c.b16 %v899, %v897
    %v944 = vpack.c.b16 %v902, %v900
    %v945 = vpack.c.b16 %v903, %v901
    %v946 = vpack.c.b16 %v906, %v904
    %v947 = vpack.c.b16 %v907, %v905
    %v948 = vpack.c.b16 %v910, %v908
    %v949 = vpack.c.b16 %v911, %v909
    %v950 = vpack.c.b16 %v914, %v912
    %v951 = vpack.c.b16 %v915, %v913
    %v952 = vpack.c.b16 %v918, %v916
    %v953 = vpack.c.b16 %v919, %v917
    %v954 = vpack.c.b16 %v922, %v920
    %v955 = vpack.c.b16 %v923, %v921
    %988 = vmatpush.bf16.msra.mxu0 %v938
    %989 = vmatpush.bf16.msra.mxu0 %v936
    %990 = vmatpush.bf16.msra.mxu0 %v934
    %991 = vmatpush.bf16.msra.mxu0 %v932
    %992 = vmatpush.bf16.msra.mxu0 %v930
    %993 = vmatpush.bf16.msra.mxu0 %v928
    %994 = vmatpush.bf16.msra.mxu0 %v926
    %995 = vmatpush.bf16.msra.mxu0 %v924
    %996 = vmatmul.bf16.gmra.mxu0 %v786
    %v997 = vpop.f32.mrf.mxu0
    %v998 = vadd.f32 %v824, %v997
    %v999 = vpop.f32.mrf.mxu0
    %1000 = vdwg.mxu0
    %1001 = vmatpush.bf16.msra.mxu0 %v954
    %1002 = vmatpush.bf16.msra.mxu0 %v952
    %1003 = vmatpush.bf16.msra.mxu0 %v950
    %1004 = vmatpush.bf16.msra.mxu0 %v948
    %1005 = vmatpush.bf16.msra.mxu0 %v946
    %1006 = vmatpush.bf16.msra.mxu0 %v944
    %1007 = vmatpush.bf16.msra.mxu0 %v942
    %1008 = vmatpush.bf16.msra.mxu0 %v940
    %1009 = vmatmul.bf16.gmra.mxu0 %v787
    %v1010 = vpop.f32.mrf.mxu0
    %v1011 = vadd.f32 %v998, %v1010
    %v1012 = vpop.f32.mrf.mxu0
    %1013 = vdwg.mxu0
    %1014 = vmatpush.bf16.msra.mxu0 %v939
    %1015 = vmatpush.bf16.msra.mxu0 %v937
    %1016 = vmatpush.bf16.msra.mxu0 %v935
    %1017 = vmatpush.bf16.msra.mxu0 %v933
    %1018 = vmatpush.bf16.msra.mxu0 %v931
    %1019 = vmatpush.bf16.msra.mxu0 %v929
    %1020 = vmatpush.bf16.msra.mxu0 %v927
    %1021 = vmatpush.bf16.msra.mxu0 %v925
    %1022 = vmatmul.bf16.gmra.mxu0 %v786
    %v1023 = vpop.f32.mrf.mxu0
    %v1024 = vadd.f32 %v825, %v1023
    %v1025 = vpop.f32.mrf.mxu0
    %1026 = vdwg.mxu0
    %1027 = vmatpush.bf16.msra.mxu0 %v955
    %1028 = vmatpush.bf16.msra.mxu0 %v953
    %1029 = vmatpush.bf16.msra.mxu0 %v951
    %1030 = vmatpush.bf16.msra.mxu0 %v949
    %1031 = vmatpush.bf16.msra.mxu0 %v947
    %1032 = vmatpush.bf16.msra.mxu0 %v945
    %1033 = vmatpush.bf16.msra.mxu0 %v943
    %1034 = vmatpush.bf16.msra.mxu0 %v941
    %1035 = vmatmul.bf16.gmra.mxu0 %v787
    %v1036 = vpop.f32.mrf.mxu0
    %v1037 = vadd.f32 %v1024, %v1036
    %v1038 = vpop.f32.mrf.mxu0
    %1039 = vdwg.mxu0
    %v1040 = vmul.f32 %v1011, 0.5
    %v1041 = vmul.f32 %v1037, 0.5
    %v1042 = vtanh.pop %v1040
    %v1043 = vtanh.pop %v1041
    %v1044 = vadd.f32 %v1042, 1.0
    %v1045 = vadd.f32 %v1043, 1.0
    %v1046 = vmul.f32 %v1044, 0.5
    %v1047 = vmul.f32 %v1045, 0.5
    %v1048 = vmul.f32 %v1011, %v1046
    %v1049 = vmul.f32 %v1037, %v1047
    %v1050 = vpack.c.bf16 %v1048, %v1048
    %v1051 = vpack.c.bf16 %v1049, %v1049
    %v1052 = vld [vmem:[#allocation11] sm:$0xf]
    %v1053 = vld [vmem:[#allocation11 + $0x4] sm:$0xf]
    %v1054 = vld [vmem:[#allocation11 + $0x8] sm:$0xf]
    %v1055 = vld [vmem:[#allocation11 + $0xc] sm:$0xf]
    %v1056 = vld [vmem:[#allocation11 + $0x10] sm:$0xf]
    %v1057 = vld [vmem:[#allocation11 + $0x14] sm:$0xf]
    %v1058 = vld [vmem:[#allocation11 + $0x18] sm:$0xf]
    %v1059 = vld [vmem:[#allocation11 + $0x1c] sm:$0xf]
    %v1060 = vld [vmem:[#allocation11 + $0x20] sm:$0xf]
    %v1061 = vld [vmem:[#allocation11 + $0x24] sm:$0xf]
    %v1062 = vld [vmem:[#allocation11 + $0x28] sm:$0xf]
    %v1063 = vld [vmem:[#allocation11 + $0x2c] sm:$0xf]
    %v1064 = vld [vmem:[#allocation11 + $0x30] sm:$0xf]
    %v1065 = vld [vmem:[#allocation11 + $0x34] sm:$0xf]
    %v1066 = vld [vmem:[#allocation11 + $0x38] sm:$0xf]
    %v1067 = vld [vmem:[#allocation11 + $0x3c] sm:$0xf]
    %v1068 = vld [vmem:[#allocation11 + $0x40] sm:$0xf]
    %v1069 = vld [vmem:[#allocation11 + $0x44] sm:$0xf]
    %v1070 = vld [vmem:[#allocation11 + $0x48] sm:$0xf]
    %v1071 = vld [vmem:[#allocation11 + $0x4c] sm:$0xf]
    %v1072 = vld [vmem:[#allocation11 + $0x50] sm:$0xf]
    %v1073 = vld [vmem:[#allocation11 + $0x54] sm:$0xf]
    %v1074 = vld [vmem:[#allocation11 + $0x58] sm:$0xf]
    %v1075 = vld [vmem:[#allocation11 + $0x5c] sm:$0xf]
    %v1076 = vld [vmem:[#allocation11 + $0x60] sm:$0xf]
    %v1077 = vld [vmem:[#allocation11 + $0x64] sm:$0xf]
    %v1078 = vld [vmem:[#allocation11 + $0x68] sm:$0xf]
    %v1079 = vld [vmem:[#allocation11 + $0x6c] sm:$0xf]
    %v1080 = vld [vmem:[#allocation11 + $0x70] sm:$0xf]
    %v1081 = vld [vmem:[#allocation11 + $0x74] sm:$0xf]
    %v1082 = vld [vmem:[#allocation11 + $0x78] sm:$0xf]
    %v1083 = vld [vmem:[#allocation11 + $0x7c] sm:$0xf]
    %v1084 = vld [vmem:[%s6] sm:$0x1]
    %v1086 = vperm.slane %v1084, 0
    %v1120 = vunpack.c.l.b16 %v1052
    %v1121 = vunpack.c.l.b16 %v1053
    %v1122 = vunpack.c.l.b16 %v1054
    %v1123 = vunpack.c.l.b16 %v1055
    %v1124 = vunpack.c.l.b16 %v1056
    %v1125 = vunpack.c.l.b16 %v1057
    %v1126 = vunpack.c.l.b16 %v1058
    %v1127 = vunpack.c.l.b16 %v1059
    %v1128 = vunpack.c.l.b16 %v1060
    %v1129 = vunpack.c.l.b16 %v1061
    %v1130 = vunpack.c.l.b16 %v1062
    %v1131 = vunpack.c.l.b16 %v1063
    %v1132 = vunpack.c.l.b16 %v1064
    %v1133 = vunpack.c.l.b16 %v1065
    %v1134 = vunpack.c.l.b16 %v1066
    %v1135 = vunpack.c.l.b16 %v1067
    %v1136 = vunpack.c.l.b16 %v1068
    %v1137 = vunpack.c.l.b16 %v1069
    %v1138 = vunpack.c.l.b16 %v1070
    %v1139 = vunpack.c.l.b16 %v1071
    %v1140 = vunpack.c.l.b16 %v1072
    %v1141 = vunpack.c.l.b16 %v1073
    %v1142 = vunpack.c.l.b16 %v1074
    %v1143 = vunpack.c.l.b16 %v1075
    %v1144 = vunpack.c.l.b16 %v1076
    %v1145 = vunpack.c.l.b16 %v1077
    %v1146 = vunpack.c.l.b16 %v1078
    %v1147 = vunpack.c.l.b16 %v1079
    %v1148 = vunpack.c.l.b16 %v1080
    %v1149 = vunpack.c.l.b16 %v1081
    %v1150 = vunpack.c.l.b16 %v1082
    %v1151 = vunpack.c.l.b16 %v1083
    %v1152 = vpack.c.b16 %v1121, %v1120
    %v1153 = vpack.c.b16 %v1123, %v1122
    %v1154 = vpack.c.b16 %v1125, %v1124
    %v1155 = vpack.c.b16 %v1127, %v1126
    %v1156 = vpack.c.b16 %v1129, %v1128
    %v1157 = vpack.c.b16 %v1131, %v1130
    %v1158 = vpack.c.b16 %v1133, %v1132
    %v1159 = vpack.c.b16 %v1135, %v1134
    %v1160 = vpack.c.b16 %v1137, %v1136
    %v1161 = vpack.c.b16 %v1139, %v1138
    %v1162 = vpack.c.b16 %v1141, %v1140
    %v1163 = vpack.c.b16 %v1143, %v1142
    %v1164 = vpack.c.b16 %v1145, %v1144
    %v1165 = vpack.c.b16 %v1147, %v1146
    %v1166 = vpack.c.b16 %v1149, %v1148
    %v1167 = vpack.c.b16 %v1151, %v1150
    %1184 = vmatpush.bf16.msra.mxu0 %v1159
    %1185 = vmatpush.bf16.msra.mxu0 %v1158
    %1186 = vmatpush.bf16.msra.mxu0 %v1157
    %1187 = vmatpush.bf16.msra.mxu0 %v1156
    %1188 = vmatpush.bf16.msra.mxu0 %v1155
    %1189 = vmatpush.bf16.msra.mxu0 %v1154
    %1190 = vmatpush.bf16.msra.mxu0 %v1153
    %1191 = vmatpush.bf16.msra.mxu0 %v1152
    %1192 = vmatmul.bf16.gmra.mxu0 %v1050
    %v1193 = vpop.f32.mrf.mxu0
    %v1194 = vadd.f32 %v1086, %v1193
    %v1195 = vpop.f32.mrf.mxu0
    %1196 = vdwg.mxu0
    %1197 = vmatpush.bf16.msra.mxu0 %v1167
    %1198 = vmatpush.bf16.msra.mxu0 %v1166
    %1199 = vmatpush.bf16.msra.mxu0 %v1165
    %1200 = vmatpush.bf16.msra.mxu0 %v1164
    %1201 = vmatpush.bf16.msra.mxu0 %v1163
    %1202 = vmatpush.bf16.msra.mxu0 %v1162
    %1203 = vmatpush.bf16.msra.mxu0 %v1161
    %1204 = vmatpush.bf16.msra.mxu0 %v1160
    %1205 = vmatmul.bf16.gmra.mxu0 %v1051
    %v1206 = vpop.f32.mrf.mxu0
    %v1207 = vadd.f32 %v1194, %v1206
    %v1208 = vpop.f32.mrf.mxu0
    %1209 = vdwg.mxu0
    %v1210 = vld [vmem:[%s7] sm:$0x1]
    %v1211 = vld [vmem:[%s7 + $0x1] sm:$0x1]
    %v1212 = vperm.slane %v1211, 0
    %v1213 = vsub.f32 %v1212, %v1207
    %v1214 = vmax.f32 %v1213, 0.0
    %vm1215 = vcmp.ne.f32.partialorder %v1213, %v1213
    %v1216 = vadd.f32 %v1213, 0.0
    %v1217 = vand.u32 2147483647, %v1213
    %v1218 = vsub.f32 0.0, %v1217
    %v1219 = vmul.f32 %v1218, 1.442695
    %v1220 = vpow.pop %v1219
    %v1221 = vadd.f32 %v1220, 1.0
    %v1222 = vlog2.pop %v1221
    %v1223 = vmul.f32 %v1222, 0.6931472
    %v1224 = vmul.f32 -0.5, %v1220
    %v1225 = vadd.f32 %v1224, 1.0
    %v1226 = vmul.f32 %v1225, %v1220
    %v1227 = vand.u32 2147483647, %v1220
    %vm1228 = vcmp.lt.f32.partialorder %v1227, 0.0004427343
    %v1229 = vsel %vm1228, %v1226, %v1223
    %v1230 = vadd.f32 %v1214, %v1229
    %v1231 = vsel %vm1215, %v1216, %v1230
    %v1232 = vsub.f32 %v1212, %v1231
    %v1233 = vperm.slane %v1210, 0
    %v1234 = vsub.f32 %v1232, %v1233
    %v1235 = vmax.f32 %v1234, 0.0
    %vm1236 = vcmp.ne.f32.partialorder %v1234, %v1234
    %v1237 = vadd.f32 %v1234, 0.0
    %v1238 = vand.u32 2147483647, %v1234
    %v1239 = vsub.f32 0.0, %v1238
    %v1240 = vmul.f32 %v1239, 1.442695
    %v1241 = vpow.pop %v1240
    %v1242 = vadd.f32 %v1241, 1.0
    %v1243 = vlog2.pop %v1242
    %v1244 = vmul.f32 %v1243, 0.6931472
    %v1245 = vmul.f32 -0.5, %v1241
    %v1246 = vadd.f32 %v1245, 1.0
    %v1247 = vmul.f32 %v1246, %v1241
    %v1248 = vand.u32 2147483647, %v1241
    %vm1249 = vcmp.lt.f32.partialorder %v1248, 0.0004427343
    %v1250 = vsel %vm1249, %v1247, %v1244
    %v1251 = vadd.f32 %v1235, %v1250
    %v1252 = vsel %vm1236, %v1237, %v1251
    %v1253 = vadd.f32 %v1233, %v1252
    %v1254 = vlaneseq
    %v1255 = vand.u32 %v1254, 127
    %vm1256 = vcmp.ge.s32.totalorder %v1255, 63
    %v1257 = vmul.f32 %v1253, 1.442695
    %v1258 = vpow.pop %v1257
    %v1259 = vsel %vm1256, %v1258, %v1207
    %1260 = vst [vmem:[#allocation13] sm:$0xff] %v1259
    // Predicated region
    $region58: #{tpu_custom_call.1} parent=1 // pred_check
      _
    $region59: #{tpu_custom_call.1} parent=1 // pred_check_branch
      %1262 = sbr.rel (0) target = $region61
    $region60: #{tpu_custom_call.1} parent=1 // pred_region
      %1264 = vsyncadd [#allocation4], 0
      %s1266 = sshll.u32 [#allocation13], 4
      %s1267 = int_to_ptr.vmem [resolvable:$true] %s1266
      %s1268 = sshll.u32 %s8, 4
      %s1269 = int_to_ptr.hbm [resolvable:$true] %s1268
      %1271 = dma.vmem_to_hbm [thread:$0]  %s1267, 128, %s1269, [#allocation4]
    $region61: #{tpu_custom_call.1} parent=1 // pred_fallthru
      _
    // Predicated region
    $region62: #{tpu_custom_call.1} parent=1 // pred_check
      _
    $region63: #{tpu_custom_call.1} parent=1 // pred_check_branch
      %1273 = sbr.rel (0) target = $region65
    $region64: #{tpu_custom_call.1} parent=1 // pred_region
      %1275 = dma.done [#allocation4], 128
    $region65: #{tpu_custom_call.1} parent=1 // pred_fallthru
      _
    %1276 = vsyncpa [#allocation3], 1
    %1277 = vsyncpa [#allocation6], 1
    %1278 = vsyncpa [#allocation9], 1
    %1279 = vsyncpa [#allocation12], 1
    %1280 = vsyncpa [#allocation4], 1

</llo_original>
